<compile_context>
chip_gen: v5e
topology: v5e:2x2
jax: 0.10.0
libtpu: 0.0.40
codegen_flags: <defaults>
</compile_context>

<pallas_src>
import jax
import jax.numpy as jnp
from jax.experimental import pallas as pl
from jax.experimental.pallas import tpu as pltpu


def jk_selfattn_kernel(xemb_ref,                      # (S*B, E)
                       w_ih_ref,                      # (E, 8*HD)
                       w_hh_ref,                      # (2*HD, 8*HD)
                       b_ref,                         # (1, 8*HD)
                       attn1_w_ref, attn1_b_ref,      # (U, DA), (1, DA)
                       attn2_w_ref, attn2_b_ref,      # (DA, R), (1, R)
                       mlp1_w_ref, mlp1_b_ref,        # (U, C),  (1, C)
                       out_ref):                      # (B, C)
    B, _ = out_ref.shape
    SB, _ = xemb_ref.shape
    S = SB // B
    U, G = w_hh_ref.shape                 # U = 2*HD, G = 8*HD
    HD = U // 2
    R = attn2_w_ref.shape[1]

    # ---- one big input projection: all steps, both dirs, all gates ----------
    xp = (jnp.dot(xemb_ref[...], w_ih_ref[...],
                  preferred_element_type=jnp.float32)
          + b_ref[...])                                          # (S*B, G)

    w_hh = w_hh_ref[...]

    # ---- lane masks, built once (comparisons only; no div/rem) --------------
    lane_g = jax.lax.broadcasted_iota(jnp.int32, (B, G), 1)
    # forward-direction lanes inside each gate quarter: [k*2HD, k*2HD + HD)
    fwd_in_gate = ((lane_g < HD)
                   | ((lane_g >= 2 * HD) & (lane_g < 3 * HD))
                   | ((lane_g >= 4 * HD) & (lane_g < 5 * HD))
                   | ((lane_g >= 6 * HD) & (lane_g < 7 * HD)))
    # the 'g' (cell-input) gate occupies the third lane quarter
    is_g_gate = (lane_g >= 2 * U) & (lane_g < 3 * U)
    lane_h = jax.lax.broadcasted_iota(jnp.int32, (B, U), 1)
    fwd_half = lane_h < HD

    # ---- fused bidirectional LSTM recurrence (statically unrolled) ----------
    h = jnp.zeros((B, U), jnp.float32)     # [h_fwd | h_bwd]
    c = jnp.zeros((B, U), jnp.float32)
    hs = []
    for j in range(S):
        xj = xp[j * B:(j + 1) * B, :]              # fwd dir consumes step j
        xr = xp[(S - 1 - j) * B:(S - j) * B, :]    # bwd dir consumes step S-1-j
        gx = jnp.where(fwd_in_gate, xj, xr)
        gates = gx + jnp.dot(h, w_hh, preferred_element_type=jnp.float32)
        act = jnp.where(is_g_gate, jnp.tanh(gates), jax.nn.sigmoid(gates))
        i_g = act[:, 0 * U:1 * U]
        f_g = act[:, 1 * U:2 * U]
        g_g = act[:, 2 * U:3 * U]
        o_g = act[:, 3 * U:4 * U]
        c = f_g * c + i_g * g_g
        h = o_g * jnp.tanh(c)
        hs.append(h)

    # Re-pair directions: H[t] = [h_fwd(t) | h_bwd(t)]; the backward hidden at
    # position t was produced at loop step S-1-t.
    H_rows = [jnp.where(fwd_half, hs[t], hs[S - 1 - t]) for t in range(S)]
    Hf = jnp.concatenate(H_rows, axis=0)            # (S*B, U), row = t*B + b

    # ---- structured self-attention, batched over all (t, b) rows ------------
    a1 = jnp.tanh(jnp.dot(Hf, attn1_w_ref[...],
                          preferred_element_type=jnp.float32)
                  + attn1_b_ref[...])                            # (S*B, DA)
    a2 = (jnp.dot(a1, attn2_w_ref[...],
                  preferred_element_type=jnp.float32)
          + attn2_b_ref[...])                                    # (S*B, R)
    # F.softmax on a 2D (batch*slen, r) tensor defaults to dim=1 (the r axis).
    a2 = a2 - jnp.max(a2, axis=-1, keepdims=True)
    e = jnp.exp(a2)
    A = e * pl.reciprocal(jnp.sum(e, axis=-1, keepdims=True), approx=True)
    # mean over r commutes through the bmm: mean_r(A^T H) == (mean_r A)^T H
    w = jnp.sum(A, axis=-1, keepdims=True) * (1.0 / R)           # (S*B, 1)

    # Weighted sum over the sequence axis, per batch row (static slices).
    Mm = jnp.zeros((B, U), jnp.float32)
    for t in range(S):
        Mm = Mm + w[t * B:(t + 1) * B, :] * H_rows[t]            # (B, U)

    # ---- readout (single lane-dense store) -----------------------------------
    out_ref[...] = (jnp.dot(Mm, mlp1_w_ref[...],
                            preferred_element_type=jnp.float32)
                    + mlp1_b_ref[...])


# ------------------------- wrapper-side weight packing -------------------------
def _pack_gate_major_cols(wf, wb, hd):
    """(in, 4*hd) x 2 directions -> (in, 8*hd) gate-major: [i_f i_b f_f f_b ...]"""
    blocks = []
    for k in range(4):
        blocks.append(wf[:, k * hd:(k + 1) * hd])
        blocks.append(wb[:, k * hd:(k + 1) * hd])
    return jnp.concatenate(blocks, axis=-1)


def _pack_w_hh_blockdiag(whf, whb, hd):
    """(hd, 4*hd) x 2 -> (2*hd, 8*hd) block-diagonal, gate-major columns."""
    zero = jnp.zeros((hd, hd), whf.dtype)
    blocks = []
    for k in range(4):
        top = jnp.concatenate([whf[:, k * hd:(k + 1) * hd], zero], axis=-1)
        bot = jnp.concatenate([zero, whb[:, k * hd:(k + 1) * hd]], axis=-1)
        blocks.append(jnp.concatenate([top, bot], axis=0))       # (2*hd, 2*hd)
    return jnp.concatenate(blocks, axis=-1)                      # (2*hd, 8*hd)


def jk_selfattn_forward(words, p):
    """words: (slen, batch) int32 token ids, as passed to the torch module."""
    embeds = p['embed'][words]                      # (S, B, E) -- glue gather
    S, B, E = embeds.shape
    HD = p['w_hh_f'].shape[0]
    C = p['mlp1_w'].shape[1]

    w_ih_big = _pack_gate_major_cols(p['w_ih_f'], p['w_ih_b'], HD)   # (E, 8HD)
    w_hh_big = _pack_w_hh_blockdiag(p['w_hh_f'], p['w_hh_b'], HD)    # (2HD, 8HD)
    b_big = _pack_gate_major_cols(p['b_f'], p['b_b'], HD)            # (1, 8HD)

    args = (embeds.reshape(S * B, E).astype(jnp.float32),
            w_ih_big, w_hh_big, b_big,
            p['attn1_w'], p['attn1_b'],
            p['attn2_w'], p['attn2_b'],
            p['mlp1_w'], p['mlp1_b'])

    return pl.pallas_call(
        jk_selfattn_kernel,
        out_shape=jax.ShapeDtypeStruct((B, C), jnp.float32),
        in_specs=[pl.BlockSpec(memory_space=pltpu.MemorySpace.VMEM)
                  for _ in args],
        out_specs=pl.BlockSpec(memory_space=pltpu.MemorySpace.VMEM),
    )(*args)


# ----------------------- pure-JAX reference for checking -----------------------
def jk_selfattn_reference(words, p):
    x = p['embed'][words.T].astype(jnp.float32)     # (B, S, E)
    B = x.shape[0]
    hd = p['w_hh_f'].shape[0]

    def cell(carry, x_t, w_ih, w_hh, b):
        h, c = carry
        g = x_t @ w_ih + h @ w_hh + b
        i = jax.nn.sigmoid(g[:, :hd])
        f = jax.nn.sigmoid(g[:, hd:2 * hd])
        gg = jnp.tanh(g[:, 2 * hd:3 * hd])
        o = jax.nn.sigmoid(g[:, 3 * hd:])
        c = f * c + i * gg
        h = o * jnp.tanh(c)
        return (h, c), h

    init = (jnp.zeros((B, hd), jnp.float32), jnp.zeros((B, hd), jnp.float32))
    xs = jnp.swapaxes(x, 0, 1)                      # (S, B, E)
    _, hf = jax.lax.scan(
        lambda ca, xt: cell(ca, xt, p['w_ih_f'], p['w_hh_f'], p['b_f']), init, xs)
    _, hb = jax.lax.scan(
        lambda ca, xt: cell(ca, xt, p['w_ih_b'], p['w_hh_b'], p['b_b']), init, xs[::-1])
    hb = hb[::-1]
    H = jnp.swapaxes(jnp.concatenate([hf, hb], axis=-1), 0, 1)   # (B, S, U)

    a1 = jnp.tanh(H @ p['attn1_w'] + p['attn1_b'])
    a2 = a1 @ p['attn2_w'] + p['attn2_b']
    A = jax.nn.softmax(a2, axis=-1)                              # (B, S, R)
    M = jnp.einsum('bsr,bsu->bru', A, H)                         # bmm(A^T, H)
    Mm = jnp.mean(M, axis=1)                                     # (B, U)
    return Mm @ p['mlp1_w'] + p['mlp1_b']


def init_params(key, vocab, e, hd, da, r, c):
    ks = jax.random.split(key, 13)

    def u(k, shape, fan_in):
        bound = 1.0 / float(fan_in) ** 0.5
        return jax.random.uniform(k, shape, jnp.float32, -bound, bound)

    U = 2 * hd
    return dict(
        embed=jax.random.normal(ks[0], (vocab, e), jnp.float32) * 0.1,
        w_ih_f=u(ks[1], (e, 4 * hd), hd),
        w_hh_f=u(ks[2], (hd, 4 * hd), hd),
        b_f=u(ks[3], (1, 4 * hd), hd),        # bias_ih + bias_hh, combined
        w_ih_b=u(ks[4], (e, 4 * hd), hd),
        w_hh_b=u(ks[5], (hd, 4 * hd), hd),
        b_b=u(ks[6], (1, 4 * hd), hd),
        attn1_w=u(ks[7], (U, da), U),
        attn1_b=u(ks[8], (1, da), U),
        attn2_w=u(ks[9], (da, r), da),
        attn2_b=u(ks[10], (1, r), da),
        mlp1_w=u(ks[11], (U, c), U),
        mlp1_b=u(ks[12], (1, c), U),
    )


if __name__ == "__main__":
    # torch module config: vocab=50, embed_dim=16, lstm_dim=16, bilstm=True
    # (so u=32), da=16, r=4, tagset_size=5, batch=2, slen=8.
    VOCAB, E, HD, DA, R, C = 50, 16, 16, 16, 4, 5
    B, S = 2, 8

    key = jax.random.PRNGKey(0)
    kw, kp = jax.random.split(key)
    params = init_params(kp, VOCAB, E, HD, DA, R, C)
    words = jax.random.randint(kw, (S, B), 0, VOCAB, dtype=jnp.int32)  # (slen, batch)

    out = jk_selfattn_forward(words, params)
    out = jax.block_until_ready(out)

    ref = jk_selfattn_reference(words, params)
    assert out.shape == (B, C), out.shape
    assert bool(jnp.all(jnp.isfinite(out)))
    assert bool(jnp.allclose(out, ref, atol=2e-2, rtol=2e-2)), (out, ref)
    print("KERNEL_OK")
</pallas_src>

<mosaic_0001>
module attributes {stable_mosaic.version = 11 : i64} {
  func.func @jk_selfattn_kernel(%arg0: memref<16x16xf32, #tpu.memory_space<vmem>>, %arg1: memref<16x128xf32, #tpu.memory_space<vmem>>, %arg2: memref<32x128xf32, #tpu.memory_space<vmem>>, %arg3: memref<1x128xf32, #tpu.memory_space<vmem>>, %arg4: memref<32x16xf32, #tpu.memory_space<vmem>>, %arg5: memref<1x16xf32, #tpu.memory_space<vmem>>, %arg6: memref<16x4xf32, #tpu.memory_space<vmem>>, %arg7: memref<1x4xf32, #tpu.memory_space<vmem>>, %arg8: memref<32x5xf32, #tpu.memory_space<vmem>>, %arg9: memref<1x5xf32, #tpu.memory_space<vmem>>, %arg10: memref<2x5xf32, #tpu.memory_space<vmem>>) attributes {dimension_semantics = [], scalar_prefetch = 0 : i64, scratch_operands = 0 : i64, tpu.core_type = #tpu.core_type<tc>} {
    %c0 = arith.constant 0 : index
    %c0_0 = arith.constant 0 : index
    %0 = vector.load %arg0[%c0, %c0_0] : memref<16x16xf32, #tpu.memory_space<vmem>>, vector<16x16xf32>
    %c0_1 = arith.constant 0 : index
    %c0_2 = arith.constant 0 : index
    %1 = vector.load %arg1[%c0_1, %c0_2] : memref<16x128xf32, #tpu.memory_space<vmem>>, vector<16x128xf32>
    %cst = arith.constant dense<0.000000e+00> : vector<16x128xf32>
    %2 = tpu.matmul %0, %1, %cst {dimension_numbers = #tpu.dot_dimension_numbers<[1], [0], [0], [1], [0, 0, 1, 1], [], []>} : vector<16x16xf32>, vector<16x128xf32>, vector<16x128xf32> -> vector<16x128xf32>
    %c0_3 = arith.constant 0 : index
    %c0_4 = arith.constant 0 : index
    %3 = vector.load %arg3[%c0_3, %c0_4] : memref<1x128xf32, #tpu.memory_space<vmem>>, vector<1x128xf32>
    %4 = vector.broadcast %3 : vector<1x128xf32> to vector<16x128xf32>
    %5 = arith.addf %2, %4 : vector<16x128xf32>
    %c0_5 = arith.constant 0 : index
    %c0_6 = arith.constant 0 : index
    %6 = vector.load %arg2[%c0_5, %c0_6] : memref<32x128xf32, #tpu.memory_space<vmem>>, vector<32x128xf32>
    %7 = tpu.iota {dimensions = array<i32: 1>} : vector<2x128xi32>
    %c16_i32 = arith.constant 16 : i32
    %8 = vector.broadcast %c16_i32 : i32 to vector<2x128xi32>
    %9 = arith.cmpi slt, %7, %8 : vector<2x128xi32>
    %c32_i32 = arith.constant 32 : i32
    %10 = vector.broadcast %c32_i32 : i32 to vector<2x128xi32>
    %11 = arith.cmpi sge, %7, %10 : vector<2x128xi32>
    %c48_i32 = arith.constant 48 : i32
    %12 = vector.broadcast %c48_i32 : i32 to vector<2x128xi32>
    %13 = arith.cmpi slt, %7, %12 : vector<2x128xi32>
    %14 = arith.andi %11, %13 : vector<2x128xi1>
    %15 = arith.ori %9, %14 : vector<2x128xi1>
    %c64_i32 = arith.constant 64 : i32
    %16 = vector.broadcast %c64_i32 : i32 to vector<2x128xi32>
    %17 = arith.cmpi sge, %7, %16 : vector<2x128xi32>
    %c80_i32 = arith.constant 80 : i32
    %18 = vector.broadcast %c80_i32 : i32 to vector<2x128xi32>
    %19 = arith.cmpi slt, %7, %18 : vector<2x128xi32>
    %20 = arith.andi %17, %19 : vector<2x128xi1>
    %21 = arith.ori %15, %20 : vector<2x128xi1>
    %c96_i32 = arith.constant 96 : i32
    %22 = vector.broadcast %c96_i32 : i32 to vector<2x128xi32>
    %23 = arith.cmpi sge, %7, %22 : vector<2x128xi32>
    %c112_i32 = arith.constant 112 : i32
    %24 = vector.broadcast %c112_i32 : i32 to vector<2x128xi32>
    %25 = arith.cmpi slt, %7, %24 : vector<2x128xi32>
    %26 = arith.andi %23, %25 : vector<2x128xi1>
    %27 = arith.ori %21, %26 : vector<2x128xi1>
    %c64_i32_7 = arith.constant 64 : i32
    %28 = vector.broadcast %c64_i32_7 : i32 to vector<2x128xi32>
    %29 = arith.cmpi sge, %7, %28 : vector<2x128xi32>
    %c96_i32_8 = arith.constant 96 : i32
    %30 = vector.broadcast %c96_i32_8 : i32 to vector<2x128xi32>
    %31 = arith.cmpi slt, %7, %30 : vector<2x128xi32>
    %32 = arith.andi %29, %31 : vector<2x128xi1>
    %33 = tpu.iota {dimensions = array<i32: 1>} : vector<2x32xi32>
    %c16_i32_9 = arith.constant 16 : i32
    %34 = vector.broadcast %c16_i32_9 : i32 to vector<2x32xi32>
    %35 = arith.cmpi slt, %33, %34 : vector<2x32xi32>
    %cst_10 = arith.constant 0.000000e+00 : f32
    %36 = vector.broadcast %cst_10 : f32 to vector<2x32xf32>
    %cst_11 = arith.constant 0.000000e+00 : f32
    %37 = vector.broadcast %cst_11 : f32 to vector<2x32xf32>
    %38 = vector.extract_strided_slice %5 {offsets = [0, 0], sizes = [2, 128], strides = [1, 1]} : vector<16x128xf32> to vector<2x128xf32>
    %39 = vector.extract_strided_slice %5 {offsets = [14, 0], sizes = [2, 128], strides = [1, 1]} : vector<16x128xf32> to vector<2x128xf32>
    %40 = arith.select %27, %38, %39 : vector<2x128xi1>, vector<2x128xf32>
    %cst_12 = arith.constant dense<0.000000e+00> : vector<2x128xf32>
    %41 = tpu.matmul %36, %6, %cst_12 {dimension_numbers = #tpu.dot_dimension_numbers<[1], [0], [0], [1], [0, 0, 1, 1], [], []>} : vector<2x32xf32>, vector<32x128xf32>, vector<2x128xf32> -> vector<2x128xf32>
    %42 = arith.addf %40, %41 : vector<2x128xf32>
    %43 = math.tanh %42 : vector<2x128xf32>
    %44 = arith.negf %42 : vector<2x128xf32>
    %45 = math.exp %44 : vector<2x128xf32>
    %cst_13 = arith.constant 1.000000e+00 : f32
    %46 = vector.broadcast %cst_13 : f32 to vector<2x128xf32>
    %47 = arith.addf %46, %45 : vector<2x128xf32>
    %48 = arith.divf %46, %47 : vector<2x128xf32>
    %49 = arith.select %32, %43, %48 : vector<2x128xi1>, vector<2x128xf32>
    %50 = vector.extract_strided_slice %49 {offsets = [0, 0], sizes = [2, 32], strides = [1, 1]} : vector<2x128xf32> to vector<2x32xf32>
    %51 = vector.extract_strided_slice %49 {offsets = [0, 32], sizes = [2, 32], strides = [1, 1]} : vector<2x128xf32> to vector<2x32xf32>
    %52 = vector.extract_strided_slice %49 {offsets = [0, 64], sizes = [2, 32], strides = [1, 1]} : vector<2x128xf32> to vector<2x32xf32>
    %53 = vector.extract_strided_slice %49 {offsets = [0, 96], sizes = [2, 32], strides = [1, 1]} : vector<2x128xf32> to vector<2x32xf32>
    %54 = arith.mulf %51, %37 : vector<2x32xf32>
    %55 = arith.mulf %50, %52 : vector<2x32xf32>
    %56 = arith.addf %54, %55 : vector<2x32xf32>
    %57 = math.tanh %56 : vector<2x32xf32>
    %58 = arith.mulf %53, %57 : vector<2x32xf32>
    %59 = vector.extract_strided_slice %5 {offsets = [2, 0], sizes = [2, 128], strides = [1, 1]} : vector<16x128xf32> to vector<2x128xf32>
    %60 = vector.extract_strided_slice %5 {offsets = [12, 0], sizes = [2, 128], strides = [1, 1]} : vector<16x128xf32> to vector<2x128xf32>
    %61 = arith.select %27, %59, %60 : vector<2x128xi1>, vector<2x128xf32>
    %cst_14 = arith.constant dense<0.000000e+00> : vector<2x128xf32>
    %62 = tpu.matmul %58, %6, %cst_14 {dimension_numbers = #tpu.dot_dimension_numbers<[1], [0], [0], [1], [0, 0, 1, 1], [], []>} : vector<2x32xf32>, vector<32x128xf32>, vector<2x128xf32> -> vector<2x128xf32>
    %63 = arith.addf %61, %62 : vector<2x128xf32>
    %64 = math.tanh %63 : vector<2x128xf32>
    %65 = arith.negf %63 : vector<2x128xf32>
    %66 = math.exp %65 : vector<2x128xf32>
    %cst_15 = arith.constant 1.000000e+00 : f32
    %67 = vector.broadcast %cst_15 : f32 to vector<2x128xf32>
    %68 = arith.addf %67, %66 : vector<2x128xf32>
    %69 = arith.divf %67, %68 : vector<2x128xf32>
    %70 = arith.select %32, %64, %69 : vector<2x128xi1>, vector<2x128xf32>
    %71 = vector.extract_strided_slice %70 {offsets = [0, 0], sizes = [2, 32], strides = [1, 1]} : vector<2x128xf32> to vector<2x32xf32>
    %72 = vector.extract_strided_slice %70 {offsets = [0, 32], sizes = [2, 32], strides = [1, 1]} : vector<2x128xf32> to vector<2x32xf32>
    %73 = vector.extract_strided_slice %70 {offsets = [0, 64], sizes = [2, 32], strides = [1, 1]} : vector<2x128xf32> to vector<2x32xf32>
    %74 = vector.extract_strided_slice %70 {offsets = [0, 96], sizes = [2, 32], strides = [1, 1]} : vector<2x128xf32> to vector<2x32xf32>
    %75 = arith.mulf %72, %56 : vector<2x32xf32>
    %76 = arith.mulf %71, %73 : vector<2x32xf32>
    %77 = arith.addf %75, %76 : vector<2x32xf32>
    %78 = math.tanh %77 : vector<2x32xf32>
    %79 = arith.mulf %74, %78 : vector<2x32xf32>
    %80 = vector.extract_strided_slice %5 {offsets = [4, 0], sizes = [2, 128], strides = [1, 1]} : vector<16x128xf32> to vector<2x128xf32>
    %81 = vector.extract_strided_slice %5 {offsets = [10, 0], sizes = [2, 128], strides = [1, 1]} : vector<16x128xf32> to vector<2x128xf32>
    %82 = arith.select %27, %80, %81 : vector<2x128xi1>, vector<2x128xf32>
    %cst_16 = arith.constant dense<0.000000e+00> : vector<2x128xf32>
    %83 = tpu.matmul %79, %6, %cst_16 {dimension_numbers = #tpu.dot_dimension_numbers<[1], [0], [0], [1], [0, 0, 1, 1], [], []>} : vector<2x32xf32>, vector<32x128xf32>, vector<2x128xf32> -> vector<2x128xf32>
    %84 = arith.addf %82, %83 : vector<2x128xf32>
    %85 = math.tanh %84 : vector<2x128xf32>
    %86 = arith.negf %84 : vector<2x128xf32>
    %87 = math.exp %86 : vector<2x128xf32>
    %cst_17 = arith.constant 1.000000e+00 : f32
    %88 = vector.broadcast %cst_17 : f32 to vector<2x128xf32>
    %89 = arith.addf %88, %87 : vector<2x128xf32>
    %90 = arith.divf %88, %89 : vector<2x128xf32>
    %91 = arith.select %32, %85, %90 : vector<2x128xi1>, vector<2x128xf32>
    %92 = vector.extract_strided_slice %91 {offsets = [0, 0], sizes = [2, 32], strides = [1, 1]} : vector<2x128xf32> to vector<2x32xf32>
    %93 = vector.extract_strided_slice %91 {offsets = [0, 32], sizes = [2, 32], strides = [1, 1]} : vector<2x128xf32> to vector<2x32xf32>
    %94 = vector.extract_strided_slice %91 {offsets = [0, 64], sizes = [2, 32], strides = [1, 1]} : vector<2x128xf32> to vector<2x32xf32>
    %95 = vector.extract_strided_slice %91 {offsets = [0, 96], sizes = [2, 32], strides = [1, 1]} : vector<2x128xf32> to vector<2x32xf32>
    %96 = arith.mulf %93, %77 : vector<2x32xf32>
    %97 = arith.mulf %92, %94 : vector<2x32xf32>
    %98 = arith.addf %96, %97 : vector<2x32xf32>
    %99 = math.tanh %98 : vector<2x32xf32>
    %100 = arith.mulf %95, %99 : vector<2x32xf32>
    %101 = vector.extract_strided_slice %5 {offsets = [6, 0], sizes = [2, 128], strides = [1, 1]} : vector<16x128xf32> to vector<2x128xf32>
    %102 = vector.extract_strided_slice %5 {offsets = [8, 0], sizes = [2, 128], strides = [1, 1]} : vector<16x128xf32> to vector<2x128xf32>
    %103 = arith.select %27, %101, %102 : vector<2x128xi1>, vector<2x128xf32>
    %cst_18 = arith.constant dense<0.000000e+00> : vector<2x128xf32>
    %104 = tpu.matmul %100, %6, %cst_18 {dimension_numbers = #tpu.dot_dimension_numbers<[1], [0], [0], [1], [0, 0, 1, 1], [], []>} : vector<2x32xf32>, vector<32x128xf32>, vector<2x128xf32> -> vector<2x128xf32>
    %105 = arith.addf %103, %104 : vector<2x128xf32>
    %106 = math.tanh %105 : vector<2x128xf32>
    %107 = arith.negf %105 : vector<2x128xf32>
    %108 = math.exp %107 : vector<2x128xf32>
    %cst_19 = arith.constant 1.000000e+00 : f32
    %109 = vector.broadcast %cst_19 : f32 to vector<2x128xf32>
    %110 = arith.addf %109, %108 : vector<2x128xf32>
    %111 = arith.divf %109, %110 : vector<2x128xf32>
    %112 = arith.select %32, %106, %111 : vector<2x128xi1>, vector<2x128xf32>
    %113 = vector.extract_strided_slice %112 {offsets = [0, 0], sizes = [2, 32], strides = [1, 1]} : vector<2x128xf32> to vector<2x32xf32>
    %114 = vector.extract_strided_slice %112 {offsets = [0, 32], sizes = [2, 32], strides = [1, 1]} : vector<2x128xf32> to vector<2x32xf32>
    %115 = vector.extract_strided_slice %112 {offsets = [0, 64], sizes = [2, 32], strides = [1, 1]} : vector<2x128xf32> to vector<2x32xf32>
    %116 = vector.extract_strided_slice %112 {offsets = [0, 96], sizes = [2, 32], strides = [1, 1]} : vector<2x128xf32> to vector<2x32xf32>
    %117 = arith.mulf %114, %98 : vector<2x32xf32>
    %118 = arith.mulf %113, %115 : vector<2x32xf32>
    %119 = arith.addf %117, %118 : vector<2x32xf32>
    %120 = math.tanh %119 : vector<2x32xf32>
    %121 = arith.mulf %116, %120 : vector<2x32xf32>
    %122 = vector.extract_strided_slice %5 {offsets = [8, 0], sizes = [2, 128], strides = [1, 1]} : vector<16x128xf32> to vector<2x128xf32>
    %123 = vector.extract_strided_slice %5 {offsets = [6, 0], sizes = [2, 128], strides = [1, 1]} : vector<16x128xf32> to vector<2x128xf32>
    %124 = arith.select %27, %122, %123 : vector<2x128xi1>, vector<2x128xf32>
    %cst_20 = arith.constant dense<0.000000e+00> : vector<2x128xf32>
    %125 = tpu.matmul %121, %6, %cst_20 {dimension_numbers = #tpu.dot_dimension_numbers<[1], [0], [0], [1], [0, 0, 1, 1], [], []>} : vector<2x32xf32>, vector<32x128xf32>, vector<2x128xf32> -> vector<2x128xf32>
    %126 = arith.addf %124, %125 : vector<2x128xf32>
    %127 = math.tanh %126 : vector<2x128xf32>
    %128 = arith.negf %126 : vector<2x128xf32>
    %129 = math.exp %128 : vector<2x128xf32>
    %cst_21 = arith.constant 1.000000e+00 : f32
    %130 = vector.broadcast %cst_21 : f32 to vector<2x128xf32>
    %131 = arith.addf %130, %129 : vector<2x128xf32>
    %132 = arith.divf %130, %131 : vector<2x128xf32>
    %133 = arith.select %32, %127, %132 : vector<2x128xi1>, vector<2x128xf32>
    %134 = vector.extract_strided_slice %133 {offsets = [0, 0], sizes = [2, 32], strides = [1, 1]} : vector<2x128xf32> to vector<2x32xf32>
    %135 = vector.extract_strided_slice %133 {offsets = [0, 32], sizes = [2, 32], strides = [1, 1]} : vector<2x128xf32> to vector<2x32xf32>
    %136 = vector.extract_strided_slice %133 {offsets = [0, 64], sizes = [2, 32], strides = [1, 1]} : vector<2x128xf32> to vector<2x32xf32>
    %137 = vector.extract_strided_slice %133 {offsets = [0, 96], sizes = [2, 32], strides = [1, 1]} : vector<2x128xf32> to vector<2x32xf32>
    %138 = arith.mulf %135, %119 : vector<2x32xf32>
    %139 = arith.mulf %134, %136 : vector<2x32xf32>
    %140 = arith.addf %138, %139 : vector<2x32xf32>
    %141 = math.tanh %140 : vector<2x32xf32>
    %142 = arith.mulf %137, %141 : vector<2x32xf32>
    %143 = vector.extract_strided_slice %5 {offsets = [10, 0], sizes = [2, 128], strides = [1, 1]} : vector<16x128xf32> to vector<2x128xf32>
    %144 = vector.extract_strided_slice %5 {offsets = [4, 0], sizes = [2, 128], strides = [1, 1]} : vector<16x128xf32> to vector<2x128xf32>
    %145 = arith.select %27, %143, %144 : vector<2x128xi1>, vector<2x128xf32>
    %cst_22 = arith.constant dense<0.000000e+00> : vector<2x128xf32>
    %146 = tpu.matmul %142, %6, %cst_22 {dimension_numbers = #tpu.dot_dimension_numbers<[1], [0], [0], [1], [0, 0, 1, 1], [], []>} : vector<2x32xf32>, vector<32x128xf32>, vector<2x128xf32> -> vector<2x128xf32>
    %147 = arith.addf %145, %146 : vector<2x128xf32>
    %148 = math.tanh %147 : vector<2x128xf32>
    %149 = arith.negf %147 : vector<2x128xf32>
    %150 = math.exp %149 : vector<2x128xf32>
    %cst_23 = arith.constant 1.000000e+00 : f32
    %151 = vector.broadcast %cst_23 : f32 to vector<2x128xf32>
    %152 = arith.addf %151, %150 : vector<2x128xf32>
    %153 = arith.divf %151, %152 : vector<2x128xf32>
    %154 = arith.select %32, %148, %153 : vector<2x128xi1>, vector<2x128xf32>
    %155 = vector.extract_strided_slice %154 {offsets = [0, 0], sizes = [2, 32], strides = [1, 1]} : vector<2x128xf32> to vector<2x32xf32>
    %156 = vector.extract_strided_slice %154 {offsets = [0, 32], sizes = [2, 32], strides = [1, 1]} : vector<2x128xf32> to vector<2x32xf32>
    %157 = vector.extract_strided_slice %154 {offsets = [0, 64], sizes = [2, 32], strides = [1, 1]} : vector<2x128xf32> to vector<2x32xf32>
    %158 = vector.extract_strided_slice %154 {offsets = [0, 96], sizes = [2, 32], strides = [1, 1]} : vector<2x128xf32> to vector<2x32xf32>
    %159 = arith.mulf %156, %140 : vector<2x32xf32>
    %160 = arith.mulf %155, %157 : vector<2x32xf32>
    %161 = arith.addf %159, %160 : vector<2x32xf32>
    %162 = math.tanh %161 : vector<2x32xf32>
    %163 = arith.mulf %158, %162 : vector<2x32xf32>
    %164 = vector.extract_strided_slice %5 {offsets = [12, 0], sizes = [2, 128], strides = [1, 1]} : vector<16x128xf32> to vector<2x128xf32>
    %165 = vector.extract_strided_slice %5 {offsets = [2, 0], sizes = [2, 128], strides = [1, 1]} : vector<16x128xf32> to vector<2x128xf32>
    %166 = arith.select %27, %164, %165 : vector<2x128xi1>, vector<2x128xf32>
    %cst_24 = arith.constant dense<0.000000e+00> : vector<2x128xf32>
    %167 = tpu.matmul %163, %6, %cst_24 {dimension_numbers = #tpu.dot_dimension_numbers<[1], [0], [0], [1], [0, 0, 1, 1], [], []>} : vector<2x32xf32>, vector<32x128xf32>, vector<2x128xf32> -> vector<2x128xf32>
    %168 = arith.addf %166, %167 : vector<2x128xf32>
    %169 = math.tanh %168 : vector<2x128xf32>
    %170 = arith.negf %168 : vector<2x128xf32>
    %171 = math.exp %170 : vector<2x128xf32>
    %cst_25 = arith.constant 1.000000e+00 : f32
    %172 = vector.broadcast %cst_25 : f32 to vector<2x128xf32>
    %173 = arith.addf %172, %171 : vector<2x128xf32>
    %174 = arith.divf %172, %173 : vector<2x128xf32>
    %175 = arith.select %32, %169, %174 : vector<2x128xi1>, vector<2x128xf32>
    %176 = vector.extract_strided_slice %175 {offsets = [0, 0], sizes = [2, 32], strides = [1, 1]} : vector<2x128xf32> to vector<2x32xf32>
    %177 = vector.extract_strided_slice %175 {offsets = [0, 32], sizes = [2, 32], strides = [1, 1]} : vector<2x128xf32> to vector<2x32xf32>
    %178 = vector.extract_strided_slice %175 {offsets = [0, 64], sizes = [2, 32], strides = [1, 1]} : vector<2x128xf32> to vector<2x32xf32>
    %179 = vector.extract_strided_slice %175 {offsets = [0, 96], sizes = [2, 32], strides = [1, 1]} : vector<2x128xf32> to vector<2x32xf32>
    %180 = arith.mulf %177, %161 : vector<2x32xf32>
    %181 = arith.mulf %176, %178 : vector<2x32xf32>
    %182 = arith.addf %180, %181 : vector<2x32xf32>
    %183 = math.tanh %182 : vector<2x32xf32>
    %184 = arith.mulf %179, %183 : vector<2x32xf32>
    %185 = vector.extract_strided_slice %5 {offsets = [14, 0], sizes = [2, 128], strides = [1, 1]} : vector<16x128xf32> to vector<2x128xf32>
    %186 = vector.extract_strided_slice %5 {offsets = [0, 0], sizes = [2, 128], strides = [1, 1]} : vector<16x128xf32> to vector<2x128xf32>
    %187 = arith.select %27, %185, %186 : vector<2x128xi1>, vector<2x128xf32>
    %cst_26 = arith.constant dense<0.000000e+00> : vector<2x128xf32>
    %188 = tpu.matmul %184, %6, %cst_26 {dimension_numbers = #tpu.dot_dimension_numbers<[1], [0], [0], [1], [0, 0, 1, 1], [], []>} : vector<2x32xf32>, vector<32x128xf32>, vector<2x128xf32> -> vector<2x128xf32>
    %189 = arith.addf %187, %188 : vector<2x128xf32>
    %190 = math.tanh %189 : vector<2x128xf32>
    %191 = arith.negf %189 : vector<2x128xf32>
    %192 = math.exp %191 : vector<2x128xf32>
    %cst_27 = arith.constant 1.000000e+00 : f32
    %193 = vector.broadcast %cst_27 : f32 to vector<2x128xf32>
    %194 = arith.addf %193, %192 : vector<2x128xf32>
    %195 = arith.divf %193, %194 : vector<2x128xf32>
    %196 = arith.select %32, %190, %195 : vector<2x128xi1>, vector<2x128xf32>
    %197 = vector.extract_strided_slice %196 {offsets = [0, 0], sizes = [2, 32], strides = [1, 1]} : vector<2x128xf32> to vector<2x32xf32>
    %198 = vector.extract_strided_slice %196 {offsets = [0, 32], sizes = [2, 32], strides = [1, 1]} : vector<2x128xf32> to vector<2x32xf32>
    %199 = vector.extract_strided_slice %196 {offsets = [0, 64], sizes = [2, 32], strides = [1, 1]} : vector<2x128xf32> to vector<2x32xf32>
    %200 = vector.extract_strided_slice %196 {offsets = [0, 96], sizes = [2, 32], strides = [1, 1]} : vector<2x128xf32> to vector<2x32xf32>
    %201 = arith.mulf %198, %182 : vector<2x32xf32>
    %202 = arith.mulf %197, %199 : vector<2x32xf32>
    %203 = arith.addf %201, %202 : vector<2x32xf32>
    %204 = math.tanh %203 : vector<2x32xf32>
    %205 = arith.mulf %200, %204 : vector<2x32xf32>
    %206 = arith.select %35, %58, %205 : vector<2x32xi1>, vector<2x32xf32>
    %207 = arith.select %35, %79, %184 : vector<2x32xi1>, vector<2x32xf32>
    %208 = arith.select %35, %100, %163 : vector<2x32xi1>, vector<2x32xf32>
    %209 = arith.select %35, %121, %142 : vector<2x32xi1>, vector<2x32xf32>
    %210 = arith.select %35, %142, %121 : vector<2x32xi1>, vector<2x32xf32>
    %211 = arith.select %35, %163, %100 : vector<2x32xi1>, vector<2x32xf32>
    %212 = arith.select %35, %184, %79 : vector<2x32xi1>, vector<2x32xf32>
    %213 = arith.select %35, %205, %58 : vector<2x32xi1>, vector<2x32xf32>
    %214 = tpu.concatenate %206, %207, %208, %209, %210, %211, %212, %213 in 0 : vector<2x32xf32>, vector<2x32xf32>, vector<2x32xf32>, vector<2x32xf32>, vector<2x32xf32>, vector<2x32xf32>, vector<2x32xf32>, vector<2x32xf32> -> vector<16x32xf32>
    %c0_28 = arith.constant 0 : index
    %c0_29 = arith.constant 0 : index
    %215 = vector.load %arg4[%c0_28, %c0_29] : memref<32x16xf32, #tpu.memory_space<vmem>>, vector<32x16xf32>
    %cst_30 = arith.constant dense<0.000000e+00> : vector<16x16xf32>
    %216 = tpu.matmul %214, %215, %cst_30 {dimension_numbers = #tpu.dot_dimension_numbers<[1], [0], [0], [1], [0, 0, 1, 1], [], []>} : vector<16x32xf32>, vector<32x16xf32>, vector<16x16xf32> -> vector<16x16xf32>
    %c0_31 = arith.constant 0 : index
    %c0_32 = arith.constant 0 : index
    %217 = vector.load %arg5[%c0_31, %c0_32] : memref<1x16xf32, #tpu.memory_space<vmem>>, vector<1x16xf32>
    %218 = vector.broadcast %217 : vector<1x16xf32> to vector<16x16xf32>
    %219 = arith.addf %216, %218 : vector<16x16xf32>
    %220 = math.tanh %219 : vector<16x16xf32>
    %c0_33 = arith.constant 0 : index
    %c0_34 = arith.constant 0 : index
    %221 = vector.load %arg6[%c0_33, %c0_34] : memref<16x4xf32, #tpu.memory_space<vmem>>, vector<16x4xf32>
    %cst_35 = arith.constant dense<0.000000e+00> : vector<16x4xf32>
    %222 = tpu.matmul %220, %221, %cst_35 {dimension_numbers = #tpu.dot_dimension_numbers<[1], [0], [0], [1], [0, 0, 1, 1], [], []>} : vector<16x16xf32>, vector<16x4xf32>, vector<16x4xf32> -> vector<16x4xf32>
    %c0_36 = arith.constant 0 : index
    %c0_37 = arith.constant 0 : index
    %223 = vector.load %arg7[%c0_36, %c0_37] : memref<1x4xf32, #tpu.memory_space<vmem>>, vector<1x4xf32>
    %224 = vector.broadcast %223 : vector<1x4xf32> to vector<16x4xf32>
    %225 = arith.addf %222, %224 : vector<16x4xf32>
    %cst_38 = arith.constant dense<0xFF800000> : vector<16xf32>
    %226 = vector.multi_reduction <maximumf>, %225, %cst_38 [1] : vector<16x4xf32> to vector<16xf32>
    %227 = vector.shape_cast %226 : vector<16xf32> to vector<16x1xf32>
    %228 = vector.broadcast %227 : vector<16x1xf32> to vector<16x4xf32>
    %229 = arith.subf %225, %228 : vector<16x4xf32>
    %230 = math.exp %229 : vector<16x4xf32>
    %cst_39 = arith.constant dense<0.000000e+00> : vector<16xf32>
    %231 = vector.multi_reduction <add>, %230, %cst_39 [1] : vector<16x4xf32> to vector<16xf32>
    %232 = vector.shape_cast %231 : vector<16xf32> to vector<16x1xf32>
    %233 = tpu.reciprocal %232 {approx = true} : vector<16x1xf32> -> vector<16x1xf32>
    %234 = vector.broadcast %233 : vector<16x1xf32> to vector<16x4xf32>
    %235 = arith.mulf %230, %234 : vector<16x4xf32>
    %cst_40 = arith.constant dense<0.000000e+00> : vector<16xf32>
    %236 = vector.multi_reduction <add>, %235, %cst_40 [1] : vector<16x4xf32> to vector<16xf32>
    %237 = vector.shape_cast %236 : vector<16xf32> to vector<16x1xf32>
    %cst_41 = arith.constant 2.500000e-01 : f32
    %238 = vector.broadcast %cst_41 : f32 to vector<16x1xf32>
    %239 = arith.mulf %237, %238 : vector<16x1xf32>
    %cst_42 = arith.constant 0.000000e+00 : f32
    %240 = vector.broadcast %cst_42 : f32 to vector<2x32xf32>
    %241 = vector.extract_strided_slice %239 {offsets = [0, 0], sizes = [2, 1], strides = [1, 1]} : vector<16x1xf32> to vector<2x1xf32>
    %242 = vector.broadcast %241 : vector<2x1xf32> to vector<2x32xf32>
    %243 = arith.mulf %242, %206 : vector<2x32xf32>
    %244 = arith.addf %240, %243 : vector<2x32xf32>
    %245 = vector.extract_strided_slice %239 {offsets = [2, 0], sizes = [2, 1], strides = [1, 1]} : vector<16x1xf32> to vector<2x1xf32>
    %246 = vector.broadcast %245 : vector<2x1xf32> to vector<2x32xf32>
    %247 = arith.mulf %246, %207 : vector<2x32xf32>
    %248 = arith.addf %244, %247 : vector<2x32xf32>
    %249 = vector.extract_strided_slice %239 {offsets = [4, 0], sizes = [2, 1], strides = [1, 1]} : vector<16x1xf32> to vector<2x1xf32>
    %250 = vector.broadcast %249 : vector<2x1xf32> to vector<2x32xf32>
    %251 = arith.mulf %250, %208 : vector<2x32xf32>
    %252 = arith.addf %248, %251 : vector<2x32xf32>
    %253 = vector.extract_strided_slice %239 {offsets = [6, 0], sizes = [2, 1], strides = [1, 1]} : vector<16x1xf32> to vector<2x1xf32>
    %254 = vector.broadcast %253 : vector<2x1xf32> to vector<2x32xf32>
    %255 = arith.mulf %254, %209 : vector<2x32xf32>
    %256 = arith.addf %252, %255 : vector<2x32xf32>
    %257 = vector.extract_strided_slice %239 {offsets = [8, 0], sizes = [2, 1], strides = [1, 1]} : vector<16x1xf32> to vector<2x1xf32>
    %258 = vector.broadcast %257 : vector<2x1xf32> to vector<2x32xf32>
    %259 = arith.mulf %258, %210 : vector<2x32xf32>
    %260 = arith.addf %256, %259 : vector<2x32xf32>
    %261 = vector.extract_strided_slice %239 {offsets = [10, 0], sizes = [2, 1], strides = [1, 1]} : vector<16x1xf32> to vector<2x1xf32>
    %262 = vector.broadcast %261 : vector<2x1xf32> to vector<2x32xf32>
    %263 = arith.mulf %262, %211 : vector<2x32xf32>
    %264 = arith.addf %260, %263 : vector<2x32xf32>
    %265 = vector.extract_strided_slice %239 {offsets = [12, 0], sizes = [2, 1], strides = [1, 1]} : vector<16x1xf32> to vector<2x1xf32>
    %266 = vector.broadcast %265 : vector<2x1xf32> to vector<2x32xf32>
    %267 = arith.mulf %266, %212 : vector<2x32xf32>
    %268 = arith.addf %264, %267 : vector<2x32xf32>
    %269 = vector.extract_strided_slice %239 {offsets = [14, 0], sizes = [2, 1], strides = [1, 1]} : vector<16x1xf32> to vector<2x1xf32>
    %270 = vector.broadcast %269 : vector<2x1xf32> to vector<2x32xf32>
    %271 = arith.mulf %270, %213 : vector<2x32xf32>
    %272 = arith.addf %268, %271 : vector<2x32xf32>
    %c0_43 = arith.constant 0 : index
    %c0_44 = arith.constant 0 : index
    %273 = vector.load %arg8[%c0_43, %c0_44] : memref<32x5xf32, #tpu.memory_space<vmem>>, vector<32x5xf32>
    %cst_45 = arith.constant dense<0.000000e+00> : vector<2x5xf32>
    %274 = tpu.matmul %272, %273, %cst_45 {dimension_numbers = #tpu.dot_dimension_numbers<[1], [0], [0], [1], [0, 0, 1, 1], [], []>} : vector<2x32xf32>, vector<32x5xf32>, vector<2x5xf32> -> vector<2x5xf32>
    %c0_46 = arith.constant 0 : index
    %c0_47 = arith.constant 0 : index
    %275 = vector.load %arg9[%c0_46, %c0_47] : memref<1x5xf32, #tpu.memory_space<vmem>>, vector<1x5xf32>
    %276 = vector.broadcast %275 : vector<1x5xf32> to vector<2x5xf32>
    %277 = arith.addf %274, %276 : vector<2x5xf32>
    %c0_48 = arith.constant 0 : index
    %c0_49 = arith.constant 0 : index
    %278 = vector.load %arg10[%c0_48, %c0_49] : memref<2x5xf32, #tpu.memory_space<vmem>>, vector<2x5xf32>
    tpu.vector_store %arg10[%c0_48, %c0_49], %277 {strides = array<i32>} : memref<2x5xf32, #tpu.memory_space<vmem>>, vector<2x5xf32>,
    return
  }
}

</mosaic_0001>

<llo_original>
// kernel: tpu_custom_call.1
$region0: #{tpu_custom_call.1}
  #allocation0 [shape = 'u32[]', space=smem, size = 0x4, offset = 0x4, fixed_abs, tag = 'smem constant byte address 0x4 - core index']
  #allocation1 [shape = 'u32[72,128]{1,0:T(1,128)}', space=vmem, size = 0x9000, scoped, tag = 'internal scratch']
  %s0 = inlined_call_operand.vmem [shape: f32[16,16], index: 0, kind: input, shape index: {}]
  %s1 = inlined_call_operand.vmem [shape: f32[16,128], index: 1, kind: input, shape index: {}]
  %s2 = inlined_call_operand.vmem [shape: f32[32,128], index: 2, kind: input, shape index: {}]
  %s3 = inlined_call_operand.vmem [shape: f32[1,128], index: 3, kind: input, shape index: {}]
  %s4 = inlined_call_operand.vmem [shape: f32[32,16], index: 4, kind: input, shape index: {}]
  %s5 = inlined_call_operand.vmem [shape: f32[1,16], index: 5, kind: input, shape index: {}]
  %s6 = inlined_call_operand.vmem [shape: f32[16,4], index: 6, kind: input, shape index: {}]
  %s7 = inlined_call_operand.vmem [shape: f32[1,4], index: 7, kind: input, shape index: {}]
  %s8 = inlined_call_operand.vmem [shape: f32[32,5], index: 8, kind: input, shape index: {}]
  %s9 = inlined_call_operand.vmem [shape: f32[1,5], index: 9, kind: input, shape index: {}]
  %s10 = inlined_call_operand.hbm [shape: f32[2,5], index: 10, kind: output, shape index: {}]
  %s11 = sld [smem:[#allocation0]]
  $region50: #{tpu_custom_call.1} parent=0
    _
  %s13 = ssub.s32 1, %s11
  %s14 = scalar_select 0, %s13, %s11
  $region1: #{tpu_custom_call.1} parent=0
    #allocation2 [shape = 'u8[1024]{0}', space=vmem, size = 0x400, scoped, tag = 'output window, operand 0, single buffered']
    #allocation3 [shape = 's32[1]{0}', space=sflag, size = 0x4, scoped, tag = 'scoped memory for tpu_custom_call.1']
    %15 = vsyncpa [#allocation3], 0
    // Predicated region
    $region2: #{tpu_custom_call.1} parent=1 // pred_check
      _
    $region3: #{tpu_custom_call.1} parent=1 // pred_check_branch
      %17 = sbr.rel (0) target = $region5
    $region4: #{tpu_custom_call.1} parent=1 // pred_region
      _
    $region5: #{tpu_custom_call.1} parent=1 // pred_fallthru
      _
    // Predicated region
    $region6: #{tpu_custom_call.1} parent=1 // pred_check
      _
    $region7: #{tpu_custom_call.1} parent=1 // pred_check_branch
      %19 = sbr.rel (0) target = $region9
    $region8: #{tpu_custom_call.1} parent=1 // pred_region
      _
    $region9: #{tpu_custom_call.1} parent=1 // pred_fallthru
      _
    // Predicated region
    $region10: #{tpu_custom_call.1} parent=1 // pred_check
      _
    $region11: #{tpu_custom_call.1} parent=1 // pred_check_branch
      %21 = sbr.rel (0) target = $region13
    $region12: #{tpu_custom_call.1} parent=1 // pred_region
      _
    $region13: #{tpu_custom_call.1} parent=1 // pred_fallthru
      _
    // Predicated region
    $region14: #{tpu_custom_call.1} parent=1 // pred_check
      _
    $region15: #{tpu_custom_call.1} parent=1 // pred_check_branch
      %23 = sbr.rel (0) target = $region17
    $region16: #{tpu_custom_call.1} parent=1 // pred_region
      _
    $region17: #{tpu_custom_call.1} parent=1 // pred_fallthru
      _
    // Predicated region
    $region18: #{tpu_custom_call.1} parent=1 // pred_check
      _
    $region19: #{tpu_custom_call.1} parent=1 // pred_check_branch
      %25 = sbr.rel (0) target = $region21
    $region20: #{tpu_custom_call.1} parent=1 // pred_region
      _
    $region21: #{tpu_custom_call.1} parent=1 // pred_fallthru
      _
    // Predicated region
    $region22: #{tpu_custom_call.1} parent=1 // pred_check
      _
    $region23: #{tpu_custom_call.1} parent=1 // pred_check_branch
      %27 = sbr.rel (0) target = $region25
    $region24: #{tpu_custom_call.1} parent=1 // pred_region
      _
    $region25: #{tpu_custom_call.1} parent=1 // pred_fallthru
      _
    // Predicated region
    $region26: #{tpu_custom_call.1} parent=1 // pred_check
      _
    $region27: #{tpu_custom_call.1} parent=1 // pred_check_branch
      %29 = sbr.rel (0) target = $region29
    $region28: #{tpu_custom_call.1} parent=1 // pred_region
      _
    $region29: #{tpu_custom_call.1} parent=1 // pred_fallthru
      _
    // Predicated region
    $region30: #{tpu_custom_call.1} parent=1 // pred_check
      _
    $region31: #{tpu_custom_call.1} parent=1 // pred_check_branch
      %31 = sbr.rel (0) target = $region33
    $region32: #{tpu_custom_call.1} parent=1 // pred_region
      _
    $region33: #{tpu_custom_call.1} parent=1 // pred_fallthru
      _
    // Predicated region
    $region34: #{tpu_custom_call.1} parent=1 // pred_check
      _
    $region35: #{tpu_custom_call.1} parent=1 // pred_check_branch
      %33 = sbr.rel (0) target = $region37
    $region36: #{tpu_custom_call.1} parent=1 // pred_region
      _
    $region37: #{tpu_custom_call.1} parent=1 // pred_fallthru
      _
    // Predicated region
    $region38: #{tpu_custom_call.1} parent=1 // pred_check
      _
    $region39: #{tpu_custom_call.1} parent=1 // pred_check_branch
      %35 = sbr.rel (0) target = $region41
    $region40: #{tpu_custom_call.1} parent=1 // pred_region
      _
    $region41: #{tpu_custom_call.1} parent=1 // pred_fallthru
      _
    %v36 = vld [vmem:[%s0] sm:$0xff]
    %v37 = vld [vmem:[%s0 + $0x8] sm:$0xff]
    %v38 = vld [vmem:[%s1] sm:$0xff]
    %v39 = vld [vmem:[%s1 + $0x8] sm:$0xff]
    %v40 = vld [vmem:[%s3] sm:$0x1]
    %v42 = vperm.slane %v40, 0
    %vm44 = vcmask 130048
    %v46 = vsel %vm44, %v36, 0
    %v49 = vsel %vm44, %v37, 0
    %51 = vmatpush.msra.mxu0 0.0
    %52 = vmatpush.msra.mxu0 0.0
    %53 = vmatpush.msra.mxu0 0.0
    %54 = vmatpush.msra.mxu0 0.0
    %55 = vmatpush.msra.mxu0 0.0
    %56 = vmatpush.msra.mxu0 0.0
    %57 = vmatpush.msra.mxu0 0.0
    %58 = vmatpush.msra.mxu0 0.0
    %59 = vmatpush.msra.mxu0 0.0
    %60 = vmatpush.msra.mxu0 0.0
    %61 = vmatpush.msra.mxu0 0.0
    %62 = vmatpush.msra.mxu0 0.0
    %63 = vmatpush.msra.mxu0 0.0
    %64 = vmatpush.msra.mxu0 0.0
    %65 = vmatpush.msra.mxu0 %v39
    %66 = vmatpush.msra.mxu0 %v38
    %67 = vmatmul.f32.gmra.mxu0 %v46
    %v68 = vpop.f32.mrf.mxu0
    %v69 = vadd.f32 %v42, %v68
    %70 = vmatmul.f32.gmra.mxu0 %v49
    %v71 = vpop.f32.mrf.mxu0
    %v72 = vadd.f32 %v42, %v71
    %73 = vdwg.mxu0
    %v74 = vld [vmem:[%s2] sm:$0xff]
    %v75 = vld [vmem:[%s2 + $0x8] sm:$0xff]
    %v76 = vld [vmem:[%s2 + $0x10] sm:$0xff]
    %v77 = vld [vmem:[%s2 + $0x18] sm:$0xff]
    %v78 = vlaneseq
    %v79 = vand.u32 %v78, 127
    %vm80 = vcmp.lt.s32.totalorder %v79, 16
    %vm81 = vcmp.ge.s32.totalorder %v79, 32
    %vm82 = vcmp.lt.s32.totalorder %v79, 48
    %vm83 = vmand %vm81, %vm82
    %vm84 = vmor %vm80, %vm83
    %vm85 = vcmp.ge.s32.totalorder %v79, 64
    %vm86 = vcmp.lt.s32.totalorder %v79, 80
    %vm87 = vmand %vm85, %vm86
    %vm88 = vmor %vm84, %vm87
    %vm89 = vcmp.ge.s32.totalorder %v79, 96
    %vm90 = vcmp.lt.s32.totalorder %v79, 112
    %vm91 = vmand %vm89, %vm90
    %vm92 = vmor %vm88, %vm91
    %vm93 = vcmp.lt.s32.totalorder %v79, 96
    %vm94 = vmand %vm85, %vm93
    %v96 = vrot.slane %v72, 6
    %v98 = vsel %vm92, %v69, %v96
    %vm99 = vcmask 261120
    %v101 = vsel %vm99, 0.0, 0
    %103 = vmatpush.msra.mxu0 0.0
    %104 = vmatpush.msra.mxu0 0.0
    %105 = vmatpush.msra.mxu0 0.0
    %106 = vmatpush.msra.mxu0 0.0
    %107 = vmatpush.msra.mxu0 0.0
    %108 = vmatpush.msra.mxu0 0.0
    %109 = vmatpush.msra.mxu0 0.0
    %110 = vmatpush.msra.mxu0 0.0
    %111 = vmatpush.msra.mxu0 0.0
    %112 = vmatpush.msra.mxu0 0.0
    %113 = vmatpush.msra.mxu0 0.0
    %114 = vmatpush.msra.mxu0 0.0
    %115 = vmatpush.msra.mxu0 %v77
    %116 = vmatpush.msra.mxu0 %v76
    %117 = vmatpush.msra.mxu0 %v75
    %118 = vmatpush.msra.mxu0 %v74
    %119 = vmatmul.f32.gmra.mxu0 %v101
    %v120 = vpop.f32.mrf.mxu0
    %v121 = vadd.f32 0.0, %v120
    %122 = vdwg.mxu0
    %v123 = vadd.f32 %v98, %v121
    %v124 = vtanh.pop %v123
    %v125 = vxor.u32 %v123, 2147483648
    %v126 = vmul.f32 %v125, 1.442695
    %v127 = vpow.pop %v126
    %v128 = vadd.f32 %v127, 1.0
    %v129 = vrcp.pop %v128
    %v130 = vmul.f32 %v128, %v129
    %v131 = vsub.f32 1.0, %v130
    %v132 = vmul.f32 %v129, %v131
    %v133 = vadd.f32 %v129, %v132
    %vm134 = vweird.f32 %v128
    %vm135 = vweird.f32 %v129
    %vm136 = vmor %vm134, %vm135
    %v137 = vsel %vm136, %v129, %v133
    %v138 = vand.u32 2147483647, %v128
    %vm139 = vcmp.eq.f32.partialorder %v138, 8.507059e+37
    %v140 = vand.u32 %v128, 2147483648
    %v141 = vor.u32 1.1754944e-38, %v140
    %v142 = vsel %vm139, %v141, %v137
    %v143 = vmul.f32 1.0, %v142
    %v144 = vsel %vm94, %v124, %v143
    %v145 = vmul.f32 %v144, 0.0
    %147 = vrot.lane.b32.xlu0 %v144, 64
    %v148 = vpop.permute.xlu0 %147
    %v150 = vmul.f32 %v144, %v148
    %152 = vrot.lane.b32.xlu0 %v150, 32
    %v153 = vpop.permute.xlu0 %152
    %v155 = vadd.f32 %v145, %v153
    %v156 = vtanh.pop %v155
    %158 = vrot.lane.b32.xlu0 %v156, 64
    %v159 = vpop.permute.xlu0 %158
    %v161 = vmul.f32 %v144, %v159
    %v162 = vrot.slane %v72, 2
    %v164 = vsel %vm92, %v69, %v162
    %166 = vrot.lane.b32.xlu0 %v161, 32
    %v167 = vpop.permute.xlu0 %166
    %v168 = vsel %vm99, %v167, 0
    %170 = vmatpush.msra.mxu0 0.0
    %171 = vmatpush.msra.mxu0 0.0
    %172 = vmatpush.msra.mxu0 0.0
    %173 = vmatpush.msra.mxu0 0.0
    %174 = vmatpush.msra.mxu0 0.0
    %175 = vmatpush.msra.mxu0 0.0
    %176 = vmatpush.msra.mxu0 0.0
    %177 = vmatpush.msra.mxu0 0.0
    %178 = vmatpush.msra.mxu0 0.0
    %179 = vmatpush.msra.mxu0 0.0
    %180 = vmatpush.msra.mxu0 0.0
    %181 = vmatpush.msra.mxu0 0.0
    %182 = vmatpush.msra.mxu0 %v77
    %183 = vmatpush.msra.mxu0 %v76
    %184 = vmatpush.msra.mxu0 %v75
    %185 = vmatpush.msra.mxu0 %v74
    %186 = vmatmul.f32.gmra.mxu0 %v168
    %v187 = vpop.f32.mrf.mxu0
    %v188 = vadd.f32 0.0, %v187
    %189 = vdwg.mxu0
    %v191 = vrot.slane %v188, 6
    %v193 = vadd.f32 %v164, %v191
    %v194 = vtanh.pop %v193
    %v195 = vxor.u32 %v193, 2147483648
    %v196 = vmul.f32 %v195, 1.442695
    %v197 = vpow.pop %v196
    %v198 = vadd.f32 %v197, 1.0
    %v199 = vrcp.pop %v198
    %v200 = vmul.f32 %v198, %v199
    %v201 = vsub.f32 1.0, %v200
    %v202 = vmul.f32 %v199, %v201
    %v203 = vadd.f32 %v199, %v202
    %vm204 = vweird.f32 %v198
    %vm205 = vweird.f32 %v199
    %vm206 = vmor %vm204, %vm205
    %v207 = vsel %vm206, %v199, %v203
    %v208 = vand.u32 2147483647, %v198
    %vm209 = vcmp.eq.f32.partialorder %v208, 8.507059e+37
    %v210 = vand.u32 %v198, 2147483648
    %v211 = vor.u32 1.1754944e-38, %v210
    %v212 = vsel %vm209, %v211, %v207
    %v213 = vmul.f32 1.0, %v212
    %v214 = vsel %vm94, %v194, %v213
    %v216 = vrot.slane %v155, 6
    %v218 = vmul.f32 %v214, %v216
    %220 = vrot.lane.b32.xlu0 %v214, 64
    %v221 = vpop.permute.xlu0 %220
    %v223 = vmul.f32 %v214, %v221
    %225 = vrot.lane.b32.xlu0 %v223, 32
    %v226 = vpop.permute.xlu0 %225
    %v228 = vadd.f32 %v218, %v226
    %v229 = vtanh.pop %v228
    %231 = vrot.lane.b32.xlu0 %v229, 64
    %v232 = vpop.permute.xlu0 %231
    %v234 = vmul.f32 %v214, %v232
    %v236 = vrot.slane %v234, 2
    %237 = vrot.lane.b32.xlu0 %v236, 32
    %v238 = vpop.permute.xlu0 %237
    %v239 = vsel %vm99, %v238, 0
    %241 = vmatpush.msra.mxu0 0.0
    %242 = vmatpush.msra.mxu0 0.0
    %243 = vmatpush.msra.mxu0 0.0
    %244 = vmatpush.msra.mxu0 0.0
    %245 = vmatpush.msra.mxu0 0.0
    %246 = vmatpush.msra.mxu0 0.0
    %247 = vmatpush.msra.mxu0 0.0
    %248 = vmatpush.msra.mxu0 0.0
    %249 = vmatpush.msra.mxu0 0.0
    %250 = vmatpush.msra.mxu0 0.0
    %251 = vmatpush.msra.mxu0 0.0
    %252 = vmatpush.msra.mxu0 0.0
    %253 = vmatpush.msra.mxu0 %v77
    %254 = vmatpush.msra.mxu0 %v76
    %255 = vmatpush.msra.mxu0 %v75
    %256 = vmatpush.msra.mxu0 %v74
    %257 = vmatmul.f32.gmra.mxu0 %v239
    %v258 = vpop.f32.mrf.mxu0
    %v259 = vadd.f32 0.0, %v258
    %260 = vdwg.mxu0
    %v262 = vrot.slane %v259, 4
    %v264 = vadd.f32 %v98, %v262
    %v265 = vtanh.pop %v264
    %v266 = vxor.u32 %v264, 2147483648
    %v267 = vmul.f32 %v266, 1.442695
    %v268 = vpow.pop %v267
    %v269 = vadd.f32 %v268, 1.0
    %v270 = vrcp.pop %v269
    %v271 = vmul.f32 %v269, %v270
    %v272 = vsub.f32 1.0, %v271
    %v273 = vmul.f32 %v270, %v272
    %v274 = vadd.f32 %v270, %v273
    %vm275 = vweird.f32 %v269
    %vm276 = vweird.f32 %v270
    %vm277 = vmor %vm275, %vm276
    %v278 = vsel %vm277, %v270, %v274
    %v279 = vand.u32 2147483647, %v269
    %vm280 = vcmp.eq.f32.partialorder %v279, 8.507059e+37
    %v281 = vand.u32 %v269, 2147483648
    %v282 = vor.u32 1.1754944e-38, %v281
    %v283 = vsel %vm280, %v282, %v278
    %v284 = vmul.f32 1.0, %v283
    %v285 = vsel %vm94, %v265, %v284
    %v287 = vrot.slane %v228, 6
    %v289 = vmul.f32 %v285, %v287
    %291 = vrot.lane.b32.xlu0 %v285, 64
    %v292 = vpop.permute.xlu0 %291
    %v294 = vmul.f32 %v285, %v292
    %296 = vrot.lane.b32.xlu0 %v294, 32
    %v297 = vpop.permute.xlu0 %296
    %v299 = vadd.f32 %v289, %v297
    %v300 = vtanh.pop %v299
    %302 = vrot.lane.b32.xlu0 %v300, 64
    %v303 = vpop.permute.xlu0 %302
    %v305 = vmul.f32 %v285, %v303
    %v307 = vrot.slane %v305, 4
    %308 = vrot.lane.b32.xlu0 %v307, 32
    %v309 = vpop.permute.xlu0 %308
    %v310 = vsel %vm99, %v309, 0
    %312 = vmatpush.msra.mxu0 0.0
    %313 = vmatpush.msra.mxu0 0.0
    %314 = vmatpush.msra.mxu0 0.0
    %315 = vmatpush.msra.mxu0 0.0
    %316 = vmatpush.msra.mxu0 0.0
    %317 = vmatpush.msra.mxu0 0.0
    %318 = vmatpush.msra.mxu0 0.0
    %319 = vmatpush.msra.mxu0 0.0
    %320 = vmatpush.msra.mxu0 0.0
    %321 = vmatpush.msra.mxu0 0.0
    %322 = vmatpush.msra.mxu0 0.0
    %323 = vmatpush.msra.mxu0 0.0
    %324 = vmatpush.msra.mxu0 %v77
    %325 = vmatpush.msra.mxu0 %v76
    %326 = vmatpush.msra.mxu0 %v75
    %327 = vmatpush.msra.mxu0 %v74
    %328 = vmatmul.f32.gmra.mxu0 %v310
    %v329 = vpop.f32.mrf.mxu0
    %v330 = vadd.f32 0.0, %v329
    %331 = vdwg.mxu0
    %v333 = vrot.slane %v330, 2
    %v335 = vadd.f32 %v164, %v333
    %v336 = vtanh.pop %v335
    %v337 = vxor.u32 %v335, 2147483648
    %v338 = vmul.f32 %v337, 1.442695
    %v339 = vpow.pop %v338
    %v340 = vadd.f32 %v339, 1.0
    %v341 = vrcp.pop %v340
    %v342 = vmul.f32 %v340, %v341
    %v343 = vsub.f32 1.0, %v342
    %v344 = vmul.f32 %v341, %v343
    %v345 = vadd.f32 %v341, %v344
    %vm346 = vweird.f32 %v340
    %vm347 = vweird.f32 %v341
    %vm348 = vmor %vm346, %vm347
    %v349 = vsel %vm348, %v341, %v345
    %v350 = vand.u32 2147483647, %v340
    %vm351 = vcmp.eq.f32.partialorder %v350, 8.507059e+37
    %v352 = vand.u32 %v340, 2147483648
    %v353 = vor.u32 1.1754944e-38, %v352
    %v354 = vsel %vm351, %v353, %v349
    %v355 = vmul.f32 1.0, %v354
    %v356 = vsel %vm94, %v336, %v355
    %v358 = vrot.slane %v299, 6
    %v360 = vmul.f32 %v356, %v358
    %362 = vrot.lane.b32.xlu0 %v356, 64
    %v363 = vpop.permute.xlu0 %362
    %v365 = vmul.f32 %v356, %v363
    %367 = vrot.lane.b32.xlu0 %v365, 32
    %v368 = vpop.permute.xlu0 %367
    %v370 = vadd.f32 %v360, %v368
    %v371 = vtanh.pop %v370
    %373 = vrot.lane.b32.xlu0 %v371, 64
    %v374 = vpop.permute.xlu0 %373
    %v376 = vmul.f32 %v356, %v374
    %v378 = vrot.slane %v69, 6
    %v380 = vsel %vm92, %v72, %v378
    %v382 = vrot.slane %v376, 6
    %383 = vrot.lane.b32.xlu0 %v382, 32
    %v384 = vpop.permute.xlu0 %383
    %v385 = vsel %vm99, %v384, 0
    %387 = vmatpush.msra.mxu0 0.0
    %388 = vmatpush.msra.mxu0 0.0
    %389 = vmatpush.msra.mxu0 0.0
    %390 = vmatpush.msra.mxu0 0.0
    %391 = vmatpush.msra.mxu0 0.0
    %392 = vmatpush.msra.mxu0 0.0
    %393 = vmatpush.msra.mxu0 0.0
    %394 = vmatpush.msra.mxu0 0.0
    %395 = vmatpush.msra.mxu0 0.0
    %396 = vmatpush.msra.mxu0 0.0
    %397 = vmatpush.msra.mxu0 0.0
    %398 = vmatpush.msra.mxu0 0.0
    %399 = vmatpush.msra.mxu0 %v77
    %400 = vmatpush.msra.mxu0 %v76
    %401 = vmatpush.msra.mxu0 %v75
    %402 = vmatpush.msra.mxu0 %v74
    %403 = vmatmul.f32.gmra.mxu0 %v385
    %v404 = vpop.f32.mrf.mxu0
    %v405 = vadd.f32 0.0, %v404
    %406 = vdwg.mxu0
    %v407 = vadd.f32 %v380, %v405
    %v408 = vtanh.pop %v407
    %v409 = vxor.u32 %v407, 2147483648
    %v410 = vmul.f32 %v409, 1.442695
    %v411 = vpow.pop %v410
    %v412 = vadd.f32 %v411, 1.0
    %v413 = vrcp.pop %v412
    %v414 = vmul.f32 %v412, %v413
    %v415 = vsub.f32 1.0, %v414
    %v416 = vmul.f32 %v413, %v415
    %v417 = vadd.f32 %v413, %v416
    %vm418 = vweird.f32 %v412
    %vm419 = vweird.f32 %v413
    %vm420 = vmor %vm418, %vm419
    %v421 = vsel %vm420, %v413, %v417
    %v422 = vand.u32 2147483647, %v412
    %vm423 = vcmp.eq.f32.partialorder %v422, 8.507059e+37
    %v424 = vand.u32 %v412, 2147483648
    %v425 = vor.u32 1.1754944e-38, %v424
    %v426 = vsel %vm423, %v425, %v421
    %v427 = vmul.f32 1.0, %v426
    %v428 = vsel %vm94, %v408, %v427
    %v430 = vrot.slane %v370, 6
    %v432 = vmul.f32 %v428, %v430
    %434 = vrot.lane.b32.xlu0 %v428, 64
    %v435 = vpop.permute.xlu0 %434
    %v437 = vmul.f32 %v428, %v435
    %439 = vrot.lane.b32.xlu0 %v437, 32
    %v440 = vpop.permute.xlu0 %439
    %v442 = vadd.f32 %v432, %v440
    %v443 = vtanh.pop %v442
    %445 = vrot.lane.b32.xlu0 %v443, 64
    %v446 = vpop.permute.xlu0 %445
    %v448 = vmul.f32 %v428, %v446
    %v449 = vrot.slane %v69, 2
    %v451 = vsel %vm92, %v72, %v449
    %453 = vrot.lane.b32.xlu0 %v448, 32
    %v454 = vpop.permute.xlu0 %453
    %v455 = vsel %vm99, %v454, 0
    %457 = vmatpush.msra.mxu0 0.0
    %458 = vmatpush.msra.mxu0 0.0
    %459 = vmatpush.msra.mxu0 0.0
    %460 = vmatpush.msra.mxu0 0.0
    %461 = vmatpush.msra.mxu0 0.0
    %462 = vmatpush.msra.mxu0 0.0
    %463 = vmatpush.msra.mxu0 0.0
    %464 = vmatpush.msra.mxu0 0.0
    %465 = vmatpush.msra.mxu0 0.0
    %466 = vmatpush.msra.mxu0 0.0
    %467 = vmatpush.msra.mxu0 0.0
    %468 = vmatpush.msra.mxu0 0.0
    %469 = vmatpush.msra.mxu0 %v77
    %470 = vmatpush.msra.mxu0 %v76
    %471 = vmatpush.msra.mxu0 %v75
    %472 = vmatpush.msra.mxu0 %v74
    %473 = vmatmul.f32.gmra.mxu0 %v455
    %v474 = vpop.f32.mrf.mxu0
    %v475 = vadd.f32 0.0, %v474
    %476 = vdwg.mxu0
    %v478 = vrot.slane %v475, 6
    %v480 = vadd.f32 %v451, %v478
    %v481 = vtanh.pop %v480
    %v482 = vxor.u32 %v480, 2147483648
    %v483 = vmul.f32 %v482, 1.442695
    %v484 = vpow.pop %v483
    %v485 = vadd.f32 %v484, 1.0
    %v486 = vrcp.pop %v485
    %v487 = vmul.f32 %v485, %v486
    %v488 = vsub.f32 1.0, %v487
    %v489 = vmul.f32 %v486, %v488
    %v490 = vadd.f32 %v486, %v489
    %vm491 = vweird.f32 %v485
    %vm492 = vweird.f32 %v486
    %vm493 = vmor %vm491, %vm492
    %v494 = vsel %vm493, %v486, %v490
    %v495 = vand.u32 2147483647, %v485
    %vm496 = vcmp.eq.f32.partialorder %v495, 8.507059e+37
    %v497 = vand.u32 %v485, 2147483648
    %v498 = vor.u32 1.1754944e-38, %v497
    %v499 = vsel %vm496, %v498, %v494
    %v500 = vmul.f32 1.0, %v499
    %v501 = vsel %vm94, %v481, %v500
    %v503 = vrot.slane %v442, 6
    %v505 = vmul.f32 %v501, %v503
    %507 = vrot.lane.b32.xlu0 %v501, 64
    %v508 = vpop.permute.xlu0 %507
    %v510 = vmul.f32 %v501, %v508
    %512 = vrot.lane.b32.xlu0 %v510, 32
    %v513 = vpop.permute.xlu0 %512
    %v515 = vadd.f32 %v505, %v513
    %v516 = vtanh.pop %v515
    %518 = vrot.lane.b32.xlu0 %v516, 64
    %v519 = vpop.permute.xlu0 %518
    %v521 = vmul.f32 %v501, %v519
    %v523 = vrot.slane %v521, 2
    %524 = vrot.lane.b32.xlu0 %v523, 32
    %v525 = vpop.permute.xlu0 %524
    %v526 = vsel %vm99, %v525, 0
    %528 = vmatpush.msra.mxu0 0.0
    %529 = vmatpush.msra.mxu0 0.0
    %530 = vmatpush.msra.mxu0 0.0
    %531 = vmatpush.msra.mxu0 0.0
    %532 = vmatpush.msra.mxu0 0.0
    %533 = vmatpush.msra.mxu0 0.0
    %534 = vmatpush.msra.mxu0 0.0
    %535 = vmatpush.msra.mxu0 0.0
    %536 = vmatpush.msra.mxu0 0.0
    %537 = vmatpush.msra.mxu0 0.0
    %538 = vmatpush.msra.mxu0 0.0
    %539 = vmatpush.msra.mxu0 0.0
    %540 = vmatpush.msra.mxu0 %v77
    %541 = vmatpush.msra.mxu0 %v76
    %542 = vmatpush.msra.mxu0 %v75
    %543 = vmatpush.msra.mxu0 %v74
    %544 = vmatmul.f32.gmra.mxu0 %v526
    %v545 = vpop.f32.mrf.mxu0
    %v546 = vadd.f32 0.0, %v545
    %547 = vdwg.mxu0
    %v549 = vrot.slane %v546, 4
    %v551 = vadd.f32 %v380, %v549
    %v552 = vtanh.pop %v551
    %v553 = vxor.u32 %v551, 2147483648
    %v554 = vmul.f32 %v553, 1.442695
    %v555 = vpow.pop %v554
    %v556 = vadd.f32 %v555, 1.0
    %v557 = vrcp.pop %v556
    %v558 = vmul.f32 %v556, %v557
    %v559 = vsub.f32 1.0, %v558
    %v560 = vmul.f32 %v557, %v559
    %v561 = vadd.f32 %v557, %v560
    %vm562 = vweird.f32 %v556
    %vm563 = vweird.f32 %v557
    %vm564 = vmor %vm562, %vm563
    %v565 = vsel %vm564, %v557, %v561
    %v566 = vand.u32 2147483647, %v556
    %vm567 = vcmp.eq.f32.partialorder %v566, 8.507059e+37
    %v568 = vand.u32 %v556, 2147483648
    %v569 = vor.u32 1.1754944e-38, %v568
    %v570 = vsel %vm567, %v569, %v565
    %v571 = vmul.f32 1.0, %v570
    %v572 = vsel %vm94, %v552, %v571
    %v574 = vrot.slane %v515, 6
    %v576 = vmul.f32 %v572, %v574
    %578 = vrot.lane.b32.xlu0 %v572, 64
    %v579 = vpop.permute.xlu0 %578
    %v581 = vmul.f32 %v572, %v579
    %583 = vrot.lane.b32.xlu0 %v581, 32
    %v584 = vpop.permute.xlu0 %583
    %v586 = vadd.f32 %v576, %v584
    %v587 = vtanh.pop %v586
    %589 = vrot.lane.b32.xlu0 %v587, 64
    %v590 = vpop.permute.xlu0 %589
    %v592 = vmul.f32 %v572, %v590
    %v594 = vrot.slane %v592, 4
    %595 = vrot.lane.b32.xlu0 %v594, 32
    %v596 = vpop.permute.xlu0 %595
    %v597 = vsel %vm99, %v596, 0
    %599 = vmatpush.msra.mxu0 0.0
    %600 = vmatpush.msra.mxu0 0.0
    %601 = vmatpush.msra.mxu0 0.0
    %602 = vmatpush.msra.mxu0 0.0
    %603 = vmatpush.msra.mxu0 0.0
    %604 = vmatpush.msra.mxu0 0.0
    %605 = vmatpush.msra.mxu0 0.0
    %606 = vmatpush.msra.mxu0 0.0
    %607 = vmatpush.msra.mxu0 0.0
    %608 = vmatpush.msra.mxu0 0.0
    %609 = vmatpush.msra.mxu0 0.0
    %610 = vmatpush.msra.mxu0 0.0
    %611 = vmatpush.msra.mxu0 %v77
    %612 = vmatpush.msra.mxu0 %v76
    %613 = vmatpush.msra.mxu0 %v75
    %614 = vmatpush.msra.mxu0 %v74
    %615 = vmatmul.f32.gmra.mxu0 %v597
    %v616 = vpop.f32.mrf.mxu0
    %v617 = vadd.f32 0.0, %v616
    %618 = vdwg.mxu0
    %v620 = vrot.slane %v617, 2
    %v622 = vadd.f32 %v451, %v620
    %v623 = vtanh.pop %v622
    %v624 = vxor.u32 %v622, 2147483648
    %v625 = vmul.f32 %v624, 1.442695
    %v626 = vpow.pop %v625
    %v627 = vadd.f32 %v626, 1.0
    %v628 = vrcp.pop %v627
    %v629 = vmul.f32 %v627, %v628
    %v630 = vsub.f32 1.0, %v629
    %v631 = vmul.f32 %v628, %v630
    %v632 = vadd.f32 %v628, %v631
    %vm633 = vweird.f32 %v627
    %vm634 = vweird.f32 %v628
    %vm635 = vmor %vm633, %vm634
    %v636 = vsel %vm635, %v628, %v632
    %v637 = vand.u32 2147483647, %v627
    %vm638 = vcmp.eq.f32.partialorder %v637, 8.507059e+37
    %v639 = vand.u32 %v627, 2147483648
    %v640 = vor.u32 1.1754944e-38, %v639
    %v641 = vsel %vm638, %v640, %v636
    %v642 = vmul.f32 1.0, %v641
    %v643 = vsel %vm94, %v623, %v642
    %v645 = vrot.slane %v586, 6
    %v647 = vmul.f32 %v643, %v645
    %649 = vrot.lane.b32.xlu0 %v643, 64
    %v650 = vpop.permute.xlu0 %649
    %v652 = vmul.f32 %v643, %v650
    %654 = vrot.lane.b32.xlu0 %v652, 32
    %v655 = vpop.permute.xlu0 %654
    %v657 = vadd.f32 %v647, %v655
    %v658 = vtanh.pop %v657
    %660 = vrot.lane.b32.xlu0 %v658, 64
    %v661 = vpop.permute.xlu0 %660
    %v663 = vmul.f32 %v643, %v661
    %v666 = vrot.slane %v663, 6
    %667 = vrot.lane.b32.xlu0 %v666, 32
    %v668 = vpop.permute.xlu0 %667
    %v670 = vsel %vm80, %v167, %v668
    %v673 = vsel %vm80, %v238, %v596
    %v676 = vsel %vm80, %v309, %v525
    %v679 = vsel %vm80, %v384, %v454
    %v680 = vsel %vm80, %v454, %v384
    %v681 = vsel %vm80, %v525, %v309
    %v682 = vsel %vm80, %v596, %v238
    %v683 = vsel %vm80, %v668, %v167
    %v685 = vrot.slane %v673, 6
    %v688 = vrot.slane %v676, 4
    %v691 = vrot.slane %v679, 2
    %v694 = vrot.slane %v681, 6
    %v697 = vrot.slane %v682, 4
    %v700 = vrot.slane %v683, 2
    %vm702 = vcmask 1041408
    %v703 = vsel %vm702, %v670, %v685
    %vm704 = vcmask 1043456
    %v705 = vsel %vm704, %v703, %v688
    %vm706 = vcmask 1045504
    %v707 = vsel %vm706, %v705, %v691
    %v708 = vsel %vm702, %v680, %v694
    %v709 = vsel %vm704, %v708, %v697
    %v710 = vsel %vm706, %v709, %v700
    %v711 = vld [vmem:[%s4] sm:$0xff]
    %v712 = vld [vmem:[%s4 + $0x8] sm:$0xff]
    %v713 = vld [vmem:[%s4 + $0x10] sm:$0xff]
    %v714 = vld [vmem:[%s4 + $0x18] sm:$0xff]
    %v715 = vld [vmem:[%s5] sm:$0x1]
    %v717 = vperm.slane %v715, 0
    %v720 = vsel %vm99, %v707, 0
    %v723 = vsel %vm99, %v710, 0
    %725 = vmatpush.msra.mxu0 0.0
    %726 = vmatpush.msra.mxu0 0.0
    %727 = vmatpush.msra.mxu0 0.0
    %728 = vmatpush.msra.mxu0 0.0
    %729 = vmatpush.msra.mxu0 0.0
    %730 = vmatpush.msra.mxu0 0.0
    %731 = vmatpush.msra.mxu0 0.0
    %732 = vmatpush.msra.mxu0 0.0
    %733 = vmatpush.msra.mxu0 0.0
    %734 = vmatpush.msra.mxu0 0.0
    %735 = vmatpush.msra.mxu0 0.0
    %736 = vmatpush.msra.mxu0 0.0
    %737 = vmatpush.msra.mxu0 %v714
    %738 = vmatpush.msra.mxu0 %v713
    %739 = vmatpush.msra.mxu0 %v712
    %740 = vmatpush.msra.mxu0 %v711
    %741 = vmatmul.f32.gmra.mxu0 %v720
    %v742 = vpop.f32.mrf.mxu0
    %v743 = vadd.f32 %v717, %v742
    %744 = vmatmul.f32.gmra.mxu0 %v723
    %v745 = vpop.f32.mrf.mxu0
    %v746 = vadd.f32 %v717, %v745
    %747 = vdwg.mxu0
    %v748 = vtanh.pop %v743
    %v749 = vtanh.pop %v746
    %v750 = vld [vmem:[%s6] sm:$0xff]
    %v751 = vld [vmem:[%s6 + $0x8] sm:$0xff]
    %v752 = vld [vmem:[%s7] sm:$0x1]
    %v754 = vperm.slane %v752, 0
    %v757 = vsel %vm44, %v748, 0
    %v760 = vsel %vm44, %v749, 0
    %762 = vmatpush.msra.mxu0 0.0
    %763 = vmatpush.msra.mxu0 0.0
    %764 = vmatpush.msra.mxu0 0.0
    %765 = vmatpush.msra.mxu0 0.0
    %766 = vmatpush.msra.mxu0 0.0
    %767 = vmatpush.msra.mxu0 0.0
    %768 = vmatpush.msra.mxu0 0.0
    %769 = vmatpush.msra.mxu0 0.0
    %770 = vmatpush.msra.mxu0 0.0
    %771 = vmatpush.msra.mxu0 0.0
    %772 = vmatpush.msra.mxu0 0.0
    %773 = vmatpush.msra.mxu0 0.0
    %774 = vmatpush.msra.mxu0 0.0
    %775 = vmatpush.msra.mxu0 0.0
    %776 = vmatpush.msra.mxu0 %v751
    %777 = vmatpush.msra.mxu0 %v750
    %778 = vmatmul.f32.gmra.mxu0 %v757
    %v779 = vpop.f32.mrf.mxu0
    %v780 = vadd.f32 %v754, %v779
    %781 = vmatmul.f32.gmra.mxu0 %v760
    %v782 = vpop.f32.mrf.mxu0
    %v783 = vadd.f32 %v754, %v782
    %784 = vdwg.mxu0
    %vm785 = vcmask 31744
    %v786 = vsel %vm785, %v780, -inf
    %787 = vmax.xlane.f32.xlu0 %v786
    %v788 = vpop.xlane.xlu0 %787
    %v789 = vsel %vm785, %v783, -inf
    %790 = vmax.xlane.f32.xlu0 %v789
    %v791 = vpop.xlane.xlu0 %790
    %v792 = vsub.f32 %v780, %v788
    %v793 = vsub.f32 %v783, %v791
    %v794 = vmul.f32 %v792, 1.442695
    %v795 = vpow.pop %v794
    %v796 = vmul.f32 %v793, 1.442695
    %v797 = vpow.pop %v796
    %v798 = vsel %vm785, %v795, 0.0
    %799 = vadd.xlane.f32.xlu0 %v798
    %v800 = vpop.xlane.xlu0 %799
    %v801 = vsel %vm785, %v797, 0.0
    %802 = vadd.xlane.f32.xlu0 %v801
    %v803 = vpop.xlane.xlu0 %802
    %v804 = vrcp.pop %v800
    %v805 = vrcp.pop %v803
    %v806 = vmul.f32 %v795, %v804
    %v807 = vmul.f32 %v797, %v805
    %v808 = vsel %vm785, %v806, 0.0
    %809 = vadd.xlane.f32.xlu0 %v808
    %v810 = vpop.xlane.xlu0 %809
    %v811 = vsel %vm785, %v807, 0.0
    %812 = vadd.xlane.f32.xlu0 %v811
    %v813 = vpop.xlane.xlu0 %812
    %v814 = vmul.f32 %v810, 0.25
    %v815 = vmul.f32 %v813, 0.25
    %v816 = vmul.f32 %v814, %v670
    %v817 = vadd.f32 %v816, 0.0
    %v818 = vmul.f32 %v814, %v685
    %v820 = vrot.slane %v818, 2
    %v822 = vadd.f32 %v817, %v820
    %v823 = vmul.f32 %v814, %v688
    %v825 = vrot.slane %v823, 4
    %v827 = vadd.f32 %v822, %v825
    %v828 = vmul.f32 %v814, %v691
    %v830 = vrot.slane %v828, 6
    %v832 = vadd.f32 %v827, %v830
    %v833 = vmul.f32 %v815, %v680
    %v834 = vadd.f32 %v832, %v833
    %v835 = vmul.f32 %v815, %v694
    %v837 = vrot.slane %v835, 2
    %v839 = vadd.f32 %v834, %v837
    %v840 = vmul.f32 %v815, %v697
    %v842 = vrot.slane %v840, 4
    %v844 = vadd.f32 %v839, %v842
    %v845 = vmul.f32 %v815, %v700
    %v847 = vrot.slane %v845, 6
    %v849 = vadd.f32 %v844, %v847
    %v850 = vld [vmem:[%s8] sm:$0xff]
    %v851 = vld [vmem:[%s8 + $0x8] sm:$0xff]
    %v852 = vld [vmem:[%s8 + $0x10] sm:$0xff]
    %v853 = vld [vmem:[%s8 + $0x18] sm:$0xff]
    %v854 = vld [vmem:[%s9] sm:$0x1]
    %v856 = vperm.slane %v854, 0
    %v859 = vsel %vm99, %v849, 0
    %861 = vmatpush.msra.mxu0 0.0
    %862 = vmatpush.msra.mxu0 0.0
    %863 = vmatpush.msra.mxu0 0.0
    %864 = vmatpush.msra.mxu0 0.0
    %865 = vmatpush.msra.mxu0 0.0
    %866 = vmatpush.msra.mxu0 0.0
    %867 = vmatpush.msra.mxu0 0.0
    %868 = vmatpush.msra.mxu0 0.0
    %869 = vmatpush.msra.mxu0 0.0
    %870 = vmatpush.msra.mxu0 0.0
    %871 = vmatpush.msra.mxu0 0.0
    %872 = vmatpush.msra.mxu0 0.0
    %873 = vmatpush.msra.mxu0 %v853
    %874 = vmatpush.msra.mxu0 %v852
    %875 = vmatpush.msra.mxu0 %v851
    %876 = vmatpush.msra.mxu0 %v850
    %877 = vmatmul.f32.gmra.mxu0 %v859
    %v878 = vpop.f32.mrf.mxu0
    %v879 = vadd.f32 %v856, %v878
    %880 = vdwg.mxu0
    %vm881 = vcmask 33792
    %882 = vst.msk [vmem:[#allocation2] sm:$0x3] %vm881, %v879
    // Predicated region
    $region42: #{tpu_custom_call.1} parent=1 // pred_check
      _
    $region43: #{tpu_custom_call.1} parent=1 // pred_check_branch
      %884 = sbr.rel (0) target = $region45
    $region44: #{tpu_custom_call.1} parent=1 // pred_region
      %886 = vsyncadd [#allocation3], 0
      %s888 = sshll.u32 [#allocation2], 4
      %s889 = int_to_ptr.vmem [resolvable:$true] %s888
      %s890 = sshll.u32 %s10, 4
      %s891 = int_to_ptr.hbm [resolvable:$true] %s890
      %893 = dma.vmem_to_hbm [thread:$0]  %s889, 32, %s891, [#allocation3]
    $region45: #{tpu_custom_call.1} parent=1 // pred_fallthru
      _
    // Predicated region
    $region46: #{tpu_custom_call.1} parent=1 // pred_check
      _
    $region47: #{tpu_custom_call.1} parent=1 // pred_check_branch
      %895 = sbr.rel (0) target = $region49
    $region48: #{tpu_custom_call.1} parent=1 // pred_region
      %897 = dma.done [#allocation3], 32
    $region49: #{tpu_custom_call.1} parent=1 // pred_fallthru
      _
    %898 = vsyncpa [#allocation3], 1

</llo_original>
